<compile_context>
chip_gen: v7x
topology: tpu7x:2x2x1
jax: 0.10.0
libtpu: 0.0.40
codegen_flags: <defaults>
</compile_context>

<pallas_src>
import functools

import jax
import jax.numpy as jnp
from jax.experimental import pallas as pl
from jax.experimental.pallas import tpu as pltpu


def _patch_proj_kernel(p_ref, w_ref, b_ref, o_ref):
    # p_ref: (1, K, S_tile)  patches, K-major (c, dt, dh, dw) x flattened positions
    # w_ref: (H, K)          flattened Conv3d weight (full, resident)
    # b_ref: (H, 1)          bias (full, resident)
    # o_ref: (1, H, S_tile)  output written directly in N, C_out, (D*H*W) order
    acc = jnp.dot(w_ref[...], p_ref[0], preferred_element_type=jnp.float32)
    acc = acc + b_ref[...].astype(jnp.float32)
    o_ref[0] = acc.astype(o_ref.dtype)


def _pick_s_tile(s_total, dim_hidden, itemsize):
    """Largest lane-dense spatial tile.

    Multiple of 128 that divides s_total (or the full extent), sized so the
    double-buffered output block stays <= ~8 MiB (fits comfortably in v7x's
    64 MiB VMEM; v5e/v6e have more headroom)."""
    max_cols = max(128, (8 * 1024 * 1024) // (2 * dim_hidden * itemsize))
    if s_total <= max_cols:
        return s_total
    tile = (max_cols // 128) * 128
    while tile >= 128:
        if s_total % tile == 0:
            return tile
        tile -= 128
    return s_total  # fallback: full extent (always a legal block shape)


def _patch_proj(patches_t, w_mat, b_mat):
    """patches_t: (b, K, S), w_mat: (H, K), b_mat: (H, 1) -> (b, H, S)."""
    b, K, S = patches_t.shape
    H = w_mat.shape[0]
    itemsize = jnp.dtype(patches_t.dtype).itemsize
    s_tile = _pick_s_tile(S, H, itemsize)
    n_s = S // s_tile

    flops = 2 * b * S * K * H
    bytes_accessed = (
        patches_t.size * itemsize
        + w_mat.size * itemsize
        + b_mat.size * itemsize
        + b * H * S * itemsize
    )

    return pl.pallas_call(
        _patch_proj_kernel,
        out_shape=jax.ShapeDtypeStruct((b, H, S), patches_t.dtype),
        grid_spec=pltpu.PrefetchScalarGridSpec(
            num_scalar_prefetch=0,
            grid=(b, n_s),
            in_specs=[
                pl.BlockSpec((1, K, s_tile), lambda ib, js: (ib, 0, js)),
                pl.BlockSpec((H, K), lambda ib, js: (0, 0)),
                pl.BlockSpec((H, 1), lambda ib, js: (0, 0)),
            ],
            out_specs=pl.BlockSpec((1, H, s_tile), lambda ib, js: (ib, 0, js)),
        ),
        compiler_params=pltpu.CompilerParams(
            dimension_semantics=("parallel", "parallel"),
            vmem_limit_bytes=48 * 1024 * 1024,
        ),
        cost_estimate=pl.CostEstimate(
            flops=flops, transcendentals=0, bytes_accessed=bytes_accessed),
    )(patches_t, w_mat, b_mat)


class PatchVideo:
    """JAX/Pallas port of the PyTorch PatchVideo module (forward only)."""

    def __init__(self, dim_c, dim_t, dim_h, dim_w, dim_hidden,
                 patch_s=2, patch_t=1, key=None, dtype=jnp.float32):
        self.patch_s = patch_s
        self.patch_t = patch_t
        self.dim_c = dim_c
        self.dim_t = dim_t
        self.dim_h = dim_h
        self.dim_w = dim_w
        self.dim_hidden = dim_hidden
        self.dtype = dtype

        if key is None:
            key = jax.random.PRNGKey(42)
        kw, kb = jax.random.split(key)
        # Conv3d weight: (dim_hidden, dim_c, patch_t, patch_s, patch_s)
        fan_in = dim_c * patch_t * patch_s * patch_s
        bound = 1.0 / (fan_in ** 0.5)
        self.weight = jax.random.uniform(
            kw, (dim_hidden, dim_c, patch_t, patch_s, patch_s),
            minval=-bound, maxval=bound, dtype=dtype)
        self.bias = jax.random.uniform(
            kb, (dim_hidden,), minval=-bound, maxval=bound, dtype=dtype)

    @functools.partial(jax.jit, static_argnums=0)
    def __call__(self, x):
        # x: (b, c, t, h, w), NCDHW like PyTorch.
        b, c, t, h, w = x.shape
        pt, ps = self.patch_t, self.patch_s
        tp, hp, wp = t // pt, h // ps, w // ps
        K = c * pt * ps * ps
        S = tp * hp * wp

        # Rearrange the NCDHW input into a (b, K, S) "patches-transposed" layout
        # so the kernel's GEMM output already lands in N, C_out, (D*H*W) order:
        # the final NCDHW result is a free reshape (no output-sized transpose
        # through HBM).  K is ordered (c, dt, dh, dw) to match Conv3d's weight
        # contraction order.
        # TODO(synk): fuse this input-side rearrangement into the kernel (grid
        # over (b, tp) with an NCDHW BlockSpec and in-kernel reorder) to drop
        # one input-sized HBM copy; input traffic is small vs output for K<<H.
        xr = x.reshape(b, c, tp, pt, hp, ps, wp, ps)
        xr = jnp.transpose(xr, (0, 1, 3, 5, 7, 2, 4, 6))  # (b, c, pt, ps, ps, tp, hp, wp)
        patches_t = xr.reshape(b, K, S)

        w_mat = self.weight.reshape(self.dim_hidden, K)    # (H, K)
        b_mat = self.bias.reshape(self.dim_hidden, 1)      # (H, 1)

        out = _patch_proj(patches_t, w_mat, b_mat)          # (b, H, S)
        return out.reshape(b, self.dim_hidden, tp, hp, wp)  # free reshape -> NCDHW


def _reference(x, weight, bias, pt, ps):
    """Pure-JAX reference: lax.conv_general_dilated in NCDHW."""
    out = jax.lax.conv_general_dilated(
        x, weight,
        window_strides=(pt, ps, ps),
        padding="VALID",
        dimension_numbers=("NCDHW", "OIDHW", "NCDHW"),
    )
    return out + bias.reshape(1, -1, 1, 1, 1)


if __name__ == "__main__":
    # Small shapes consistent with the module.
    b, c, t, h, w = 2, 4, 4, 16, 16
    dim_hidden = 32
    patch_s, patch_t = 2, 1

    key = jax.random.PRNGKey(0)
    kx, kp = jax.random.split(key)
    x = jax.random.normal(kx, (b, c, t, h, w), dtype=jnp.float32)

    mod = PatchVideo(c, t, h, w, dim_hidden,
                     patch_s=patch_s, patch_t=patch_t, key=kp)

    out = jax.block_until_ready(mod(x))
    ref = jax.block_until_ready(_reference(x, mod.weight, mod.bias, patch_t, patch_s))

    assert out.shape == (b, dim_hidden, t // patch_t, h // patch_s, w // patch_s), out.shape
    assert jnp.allclose(out, ref, atol=1e-4, rtol=1e-4), float(jnp.abs(out - ref).max())

    print("KERNEL_OK")
</pallas_src>

<mosaic_0001>
module attributes {stable_mosaic.version = 11 : i64} {
  func.func @_patch_proj_kernel(%arg0: i32, %arg1: i32, %arg2: memref<1x16x256xf32, #tpu.memory_space<vmem>>, %arg3: memref<32x16xf32, #tpu.memory_space<vmem>>, %arg4: memref<32x1xf32, #tpu.memory_space<vmem>>, %arg5: memref<1x32x256xf32, #tpu.memory_space<vmem>>) attributes {dimension_semantics = [#tpu.dimension_semantics<parallel>, #tpu.dimension_semantics<parallel>], iteration_bounds = array<i64: 2, 1>, scalar_prefetch = 0 : i64, scratch_operands = 0 : i64, tpu.core_type = #tpu.core_type<tc>, window_params = [{transform_indices = @transform_0, window_bounds = array<i64: 1, 16, 256>}, {pipeline_mode = #tpu.pipeline_mode<synchronous>, transform_indices = @transform_1, window_bounds = array<i64: 32, 16>}, {pipeline_mode = #tpu.pipeline_mode<synchronous>, transform_indices = @transform_2, window_bounds = array<i64: 32, 1>}, {transform_indices = @transform_3, window_bounds = array<i64: 1, 32, 256>}]} {
    %c0 = arith.constant 0 : index
    %c0_0 = arith.constant 0 : index
    %0 = vector.load %arg3[%c0, %c0_0] : memref<32x16xf32, #tpu.memory_space<vmem>>, vector<32x16xf32>
    %c0_1 = arith.constant 0 : index
    %c0_2 = arith.constant 0 : index
    %c0_3 = arith.constant 0 : index
    %1 = vector.load %arg2[%c0_1, %c0_2, %c0_3] : memref<1x16x256xf32, #tpu.memory_space<vmem>>, vector<1x16x256xf32>
    %2 = vector.shape_cast %1 : vector<1x16x256xf32> to vector<16x256xf32>
    %cst = arith.constant dense<0.000000e+00> : vector<32x256xf32>
    %3 = tpu.matmul %0, %2, %cst {dimension_numbers = #tpu.dot_dimension_numbers<[1], [0], [0], [1], [0, 0, 1, 1], [], []>} : vector<32x16xf32>, vector<16x256xf32>, vector<32x256xf32> -> vector<32x256xf32>
    %c0_4 = arith.constant 0 : index
    %c0_5 = arith.constant 0 : index
    %4 = vector.load %arg4[%c0_4, %c0_5] : memref<32x1xf32, #tpu.memory_space<vmem>>, vector<32x1xf32>
    %5 = vector.broadcast %4 : vector<32x1xf32> to vector<32x256xf32>
    %6 = arith.addf %3, %5 : vector<32x256xf32>
    %c0_6 = arith.constant 0 : index
    %c0_7 = arith.constant 0 : index
    %c0_8 = arith.constant 0 : index
    %7 = vector.load %arg5[%c0_6, %c0_7, %c0_8] : memref<1x32x256xf32, #tpu.memory_space<vmem>>, vector<1x32x256xf32>
    %8 = vector.shape_cast %7 : vector<1x32x256xf32> to vector<32x256xf32>
    %9 = vector.shape_cast %6 : vector<32x256xf32> to vector<1x32x256xf32>
    tpu.vector_store %arg5[%c0_6, %c0_7, %c0_8], %9 {strides = array<i32>} : memref<1x32x256xf32, #tpu.memory_space<vmem>>, vector<1x32x256xf32>,
    return
  }
  func.func @transform_0(%arg0: i32, %arg1: i32) -> (i32, i32, i32) {
    %c0_i32 = arith.constant 0 : i32
    %c0_i32_0 = arith.constant 0 : i32
    return %arg0, %c0_i32, %arg1 : i32, i32, i32
  }
  func.func @transform_1(%arg0: i32, %arg1: i32) -> (i32, i32) {
    %c0_i32 = arith.constant 0 : i32
    %c0_i32_0 = arith.constant 0 : i32
    %c0_i32_1 = arith.constant 0 : i32
    return %c0_i32, %c0_i32_0 : i32, i32
  }
  func.func @transform_2(%arg0: i32, %arg1: i32) -> (i32, i32) {
    %c0_i32 = arith.constant 0 : i32
    %c0_i32_0 = arith.constant 0 : i32
    %c0_i32_1 = arith.constant 0 : i32
    return %c0_i32, %c0_i32_0 : i32, i32
  }
  func.func @transform_3(%arg0: i32, %arg1: i32) -> (i32, i32, i32) {
    %c0_i32 = arith.constant 0 : i32
    %c0_i32_0 = arith.constant 0 : i32
    return %arg0, %c0_i32, %arg1 : i32, i32, i32
  }
}

</mosaic_0001>

<llo_original>
// kernel: a_call__.1
$region0: #{a_call__.1}
  #allocation0 [shape = 'u32[]', space=smem, size = 0x4, offset = 0x4, fixed_abs, tag = 'smem constant byte address 0x4 - core index']
  #allocation1 [shape = 'u32[144,128]{1,0:T(1,128)}', space=vmem, size = 0x12000, scoped, tag = 'internal scratch']
  %s0 = inlined_call_operand.vmem [shape: f32[2,16,256], index: 0, kind: input, shape index: {}]
  %s1 = inlined_call_operand.vmem [shape: f32[32,16], index: 1, kind: input, shape index: {}]
  %s2 = inlined_call_operand.vmem [shape: f32[32,1], index: 2, kind: input, shape index: {}]
  %s3 = inlined_call_operand.vmem [shape: f32[2,32,256], index: 3, kind: output, shape index: {}]
  %s4 = sld [smem:[#allocation0]]
  $region45: #{a_call__.1} parent=0
    _
  %s6 = ssub.s32 1, %s4
  %s7 = scalar_select 0, %s6, %s4
  loop: start=0, step=1, limit=4
  $region2: #{a_call__.1} parent=0 // loop_pre_header
    _
  $region3: #{a_call__.1} parent=0 // loop_header
    %s9 = sphi 0, %s13
    %p10 = scmp.ge.s32.totalorder %s9, 4
    %s16 = sphi 0, %s28
    %s17 = sphi 0, %s24
    %s18 = sphi 0, %s16
    %s19 = sphi 0, %s17
    %s20 = sphi 0, %s18
    %s21 = sphi 0, %s19
    %s33 = sphi 0, %s35
    %s36 = sphi 0, %s33
    %s37 = sphi 0, %s36
    %s53 = sphi 0, %s37
    %s57 = sphi 0, %s57
    %s59 = sphi 0, %s57
    %s60 = sphi 0, %s59
    %s74 = sphi 0, %s60
    %s78 = sphi 0, %s78
    %s80 = sphi 0, %s78
    %s81 = sphi 0, %s80
    %s95 = sphi 0, %s81
    %s103 = sphi 0, %s105
    %s106 = sphi 0, %s103
    %s107 = sphi 0, %s106
    %s123 = sphi 0, %s107
  $region4: #{a_call__.1} parent=0 // loop_header_branch
    %12 = sbr.rel (%p10) target = $region8
  $region5: #{a_call__.1} parent=0 // loop_body
    %s14 = ssub.s32 %s9, 1
    %s15 = ssub.s32 %s9, 2
    %s22 = sadd.s32 1, %s17
    %p23 = scmp.ge.s32.totalorder %s22, 1
    %s24 = scalar_select %p23, 0, %s22
    %s25 = sadd.s32 1, %s16
    %s26 = scalar_select %p23, %s25, %s16
    %p27 = scmp.ge.s32.totalorder %s26, 2
    %s28 = scalar_select %p27, 0, %s26
    %s29 = ssub.s32 %s16, %s28
    %s30 = ssub.s32 %s17, %s24
    %s31 = sor.u32 %s29, %s30
    %p32 = scmp.eq.s32.totalorder %s31, 0
    %s34 = sadd.s32 %s33, 1
    %s35 = scalar_select %p32, %s33, %s34
    %p38 = pneg %p32
    %p39 = scmp.eq.s32.totalorder %s9, 1
    %p40 = por %p38, %p39
    %p41 = scmp.ne.s32.totalorder %s33, %s36
    %p42 = scmp.eq.s32.totalorder %s9, 0
    %p43 = por %p41, %p42
    %p44 = scmp.ne.s32.totalorder %s33, %s36
    %p45 = scmp.eq.s32.totalorder %s14, 1
    %p46 = por %p44, %p45
    %p47 = scmp.ne.s32.totalorder %s36, %s37
    %p48 = scmp.eq.s32.totalorder %s14, 0
    %p49 = por %p47, %p48
    %p50 = scmp.ne.s32.totalorder %s36, %s37
    %p51 = scmp.eq.s32.totalorder %s15, 1
    %p52 = por %p50, %p51
    %p54 = scmp.ne.s32.totalorder %s37, %s53
    %p55 = scmp.eq.s32.totalorder %s15, 0
    %p56 = por %p54, %p55
    %s58 = sadd.s32 %s57, 1
    %p61 = scmp.eq.s32.totalorder %s9, 1
    %p62 = scmp.ne.s32.totalorder %s57, %s59
    %p63 = scmp.eq.s32.totalorder %s9, 0
    %p64 = por %p62, %p63
    %p65 = scmp.ne.s32.totalorder %s57, %s59
    %p66 = scmp.eq.s32.totalorder %s14, 1
    %p67 = por %p65, %p66
    %p68 = scmp.ne.s32.totalorder %s59, %s60
    %p69 = scmp.eq.s32.totalorder %s14, 0
    %p70 = por %p68, %p69
    %p71 = scmp.ne.s32.totalorder %s59, %s60
    %p72 = scmp.eq.s32.totalorder %s15, 1
    %p73 = por %p71, %p72
    %p75 = scmp.ne.s32.totalorder %s60, %s74
    %p76 = scmp.eq.s32.totalorder %s15, 0
    %p77 = por %p75, %p76
    %s79 = sadd.s32 %s78, 1
    %p82 = scmp.eq.s32.totalorder %s9, 1
    %p83 = scmp.ne.s32.totalorder %s78, %s80
    %p84 = scmp.eq.s32.totalorder %s9, 0
    %p85 = por %p83, %p84
    %p86 = scmp.ne.s32.totalorder %s78, %s80
    %p87 = scmp.eq.s32.totalorder %s14, 1
    %p88 = por %p86, %p87
    %p89 = scmp.ne.s32.totalorder %s80, %s81
    %p90 = scmp.eq.s32.totalorder %s14, 0
    %p91 = por %p89, %p90
    %p92 = scmp.ne.s32.totalorder %s80, %s81
    %p93 = scmp.eq.s32.totalorder %s15, 1
    %p94 = por %p92, %p93
    %p96 = scmp.ne.s32.totalorder %s81, %s95
    %p97 = scmp.eq.s32.totalorder %s15, 0
    %p98 = por %p96, %p97
    %s99 = ssub.s32 %s16, %s28
    %s100 = ssub.s32 %s17, %s24
    %s101 = sor.u32 %s99, %s100
    %p102 = scmp.eq.s32.totalorder %s101, 0
    %s104 = sadd.s32 %s103, 1
    %s105 = scalar_select %p102, %s103, %s104
    %p108 = pneg %p102
    %p109 = scmp.eq.s32.totalorder %s9, 1
    %p110 = por %p108, %p109
    %p111 = scmp.ne.s32.totalorder %s103, %s106
    %p112 = scmp.eq.s32.totalorder %s9, 0
    %p113 = por %p111, %p112
    %p114 = scmp.ne.s32.totalorder %s103, %s106
    %p115 = scmp.eq.s32.totalorder %s14, 1
    %p116 = por %p114, %p115
    %p117 = scmp.ne.s32.totalorder %s106, %s107
    %p118 = scmp.eq.s32.totalorder %s14, 0
    %p119 = por %p117, %p118
    %p120 = scmp.ne.s32.totalorder %s106, %s107
    %p121 = scmp.eq.s32.totalorder %s15, 1
    %p122 = por %p120, %p121
    %p124 = scmp.ne.s32.totalorder %s107, %s123
    %p125 = scmp.eq.s32.totalorder %s15, 0
    %p126 = por %p124, %p125
    %p127 = scmp.le.s32.totalorder 1, %s9
    %p128 = scmp.lt.s32.totalorder %s9, 3
    %p129 = pnand %p127, %p128
    %p130 = pneg %p129
    // Predicated region
    $region9: #{a_call__.1} parent=5 // pred_check
      _
    $region10: #{a_call__.1} parent=5 // pred_check_branch
      %132 = sbr.rel (%p129) target = $region12
    $region11: #{a_call__.1} parent=5 // pred_region
      %s133 = ssub.s32 %s9, 1
      // Predicated region
      $region13: #{a_call__.1} parent=11 // pred_check
        %p134 = pneg %p70
      $region14: #{a_call__.1} parent=11 // pred_check_branch
        %136 = sbr.rel (%p134) target = $region16
      $region15: #{a_call__.1} parent=11 // pred_region
        _
      $region16: #{a_call__.1} parent=11 // pred_fallthru
        _
      // Predicated region
      $region17: #{a_call__.1} parent=11 // pred_check
        %p137 = pneg %p91
      $region18: #{a_call__.1} parent=11 // pred_check_branch
        %139 = sbr.rel (%p137) target = $region20
      $region19: #{a_call__.1} parent=11 // pred_region
        _
      $region20: #{a_call__.1} parent=11 // pred_fallthru
        _
    $region12: #{a_call__.1} parent=5 // pred_fallthru
      _
    %p140 = scmp.lt.s32.totalorder %s9, 2
    // Predicated region
    $region21: #{a_call__.1} parent=5 // pred_check
      %p141 = pneg %p140
    $region22: #{a_call__.1} parent=5 // pred_check_branch
      %143 = sbr.rel (%p141) target = $region24
    $region23: #{a_call__.1} parent=5 // pred_region
      // Predicated region
      $region25: #{a_call__.1} parent=23 // pred_check
        %p144 = pneg %p43
      $region26: #{a_call__.1} parent=23 // pred_check_branch
        %146 = sbr.rel (%p144) target = $region28
      $region27: #{a_call__.1} parent=23 // pred_region
        %s147 = smul.u32 2, %s17
        %p148 = scmp.lt.s32.totalorder %s16, 1
        %s149 = scalar_select %p148, %s16, 1
        %p150 = scmp.lt.s32.totalorder %s147, 1
        %s151 = scalar_select %p150, %s147, 1
        %s152 = smul.addr %s149, 4
        %s153 = sadd.s32 %s151, %s152
        %s154 = smul.addr %s153, 8
        %s155 = scalar_lea.vmem %s0, %s154
        %s156 = smul.u32 2, %s17
      $region28: #{a_call__.1} parent=23 // pred_fallthru
        _
    $region24: #{a_call__.1} parent=5 // pred_fallthru
      _
    %p157 = scmp.le.s32.totalorder 1, %s9
    %p158 = scmp.lt.s32.totalorder %s9, 3
    %p159 = pnand %p157, %p158
    %p160 = pneg %p159
    // Predicated region
    $region29: #{a_call__.1} parent=5 // pred_check
      _
    $region30: #{a_call__.1} parent=5 // pred_check_branch
      %162 = sbr.rel (%p159) target = $region32
    $region31: #{a_call__.1} parent=5 // pred_region
      %s163 = ssub.s32 %s9, 1
      %s164 = smul.u32 2, %s19
      %p165 = scmp.lt.s32.totalorder %s18, 1
      %s166 = scalar_select %p165, %s18, 1
      %p167 = scmp.lt.s32.totalorder %s164, 1
      %s168 = scalar_select %p167, %s164, 1
      %s169 = smul.addr %s166, 4
      %s170 = sadd.s32 %s168, %s169
      %s171 = smul.addr %s170, 8
      %s172 = scalar_lea.vmem %s0, %s171
      %p173 = pneg %p49
      %p174 = pneg %p46
      %p175 = pneg %p70
      %p176 = pneg %p67
      %p177 = pneg %p91
      %p178 = pneg %p88
      %p179 = pneg %p119
      %p180 = pneg %p116
      %s181 = smul.u32 2, %s19
      %p182 = scmp.lt.s32.totalorder %s18, 1
      %s183 = scalar_select %p182, %s18, 1
      %p184 = scmp.lt.s32.totalorder %s181, 1
      %s185 = scalar_select %p184, %s181, 1
      %s186 = smul.addr %s183, 8
      %s187 = sadd.s32 %s185, %s186
      %s188 = smul.addr %s187, 8
      %s189 = scalar_lea.vmem %s3, %s188
      %s190 = smul.u32 2, %s19
      %p191 = scmp.lt.s32.totalorder %s18, 1
      %s192 = scalar_select %p191, %s18, 1
      %p193 = scmp.lt.s32.totalorder %s190, 1
      %s194 = scalar_select %p193, %s190, 1
      %s195 = smul.addr %s192, 4
      %s196 = sadd.s32 %s194, %s195
      %s197 = smul.addr %s196, 8
      %s198 = scalar_lea.vmem %s0, %s197
      %s199 = smul.u32 2, %s19
      %s200 = smul.u32 2, %s19
      %p201 = scmp.lt.s32.totalorder %s18, 1
      %s202 = scalar_select %p201, %s18, 1
      %p203 = scmp.lt.s32.totalorder %s200, 1
      %s204 = scalar_select %p203, %s200, 1
      %s205 = smul.addr %s202, 8
      %s206 = sadd.s32 %s204, %s205
      %s207 = smul.addr %s206, 8
      %s208 = scalar_lea.vmem %s3, %s207
      %s209 = smul.u32 2, %s19
      %v210 = vld [vmem:[%s1] sm:$0xff]
      %v211 = vld [vmem:[%s1 + $0x8] sm:$0xff]
      %v212 = vld [vmem:[%s1 + $0x10] sm:$0xff]
      %v213 = vld [vmem:[%s1 + $0x18] sm:$0xff]
      %v214 = vld [vmem:[%s198] sm:$0xff]
      %v215 = vld [vmem:[%s198 + $0x8] sm:$0xff]
      %v216 = vld [vmem:[%s198 + $0x10] sm:$0xff]
      %v217 = vld [vmem:[%s198 + $0x18] sm:$0xff]
      %v218 = vld [vmem:[%s2] sm:$0xff]
      %v219 = vld [vmem:[%s2 + $0x8] sm:$0xff]
      %v220 = vld [vmem:[%s2 + $0x10] sm:$0xff]
      %v221 = vld [vmem:[%s2 + $0x18] sm:$0xff]
      %223 = vset.pattern.permute.xlu0 0
      %224 = vperm.xlu0 %223, %v218
      %v225 = vpop.permute.xlu0 %224
      %228 = vset.pattern.permute.xlu0 0
      %229 = vperm.xlu0 %228, %v219
      %v230 = vpop.permute.xlu0 %229
      %233 = vset.pattern.permute.xlu0 0
      %234 = vperm.xlu0 %233, %v220
      %v235 = vpop.permute.xlu0 %234
      %238 = vset.pattern.permute.xlu0 0
      %239 = vperm.xlu0 %238, %v221
      %v240 = vpop.permute.xlu0 %239
      %vm242 = vcmask 130048
      %v244 = vsel %vm242, %v210, 0
      %v247 = vsel %vm242, %v211, 0
      %v250 = vsel %vm242, %v212, 0
      %v253 = vsel %vm242, %v213, 0
      %255 = vmatprep.subr.mxu0 %v215
      %256 = vmatpush1.msra.mxu0 %v214
      %257 = vmatprep.subr.mxu0 %v217
      %258 = vmatpush1.msra.mxu0 %v216
      %259 = vmatprep.subr.mxu0 0.0
      %260 = vmatpush1.msra.mxu0 0.0
      %261 = vmatprep.subr.mxu0 0.0
      %262 = vmatpush1.msra.mxu0 0.0
      %263 = vmatprep.subr.mxu0 0.0
      %264 = vmatpush1.msra.mxu0 0.0
      %265 = vmatprep.subr.mxu0 0.0
      %266 = vmatpush1.msra.mxu0 0.0
      %267 = vmatprep.subr.mxu0 0.0
      %268 = vmatpush1.msra.mxu0 0.0
      %269 = vmatprep.subr.mxu0 0.0
      %270 = vmatpush1.msra.mxu0 0.0
      %271 = vmatprep.subr.mxu0 0.0
      %272 = vmatpush1.msra.mxu0 0.0
      %273 = vmatprep.subr.mxu0 0.0
      %274 = vmatpush1.msra.mxu0 0.0
      %275 = vmatprep.subr.mxu0 0.0
      %276 = vmatpush1.msra.mxu0 0.0
      %277 = vmatprep.subr.mxu0 0.0
      %278 = vmatpush1.msra.mxu0 0.0
      %279 = vmatprep.subr.mxu0 0.0
      %280 = vmatpush1.msra.mxu0 0.0
      %281 = vmatprep.subr.mxu0 0.0
      %282 = vmatpush1.msra.mxu0 0.0
      %283 = vmatprep.subr.mxu0 0.0
      %284 = vmatpush1.msra.mxu0 0.0
      %285 = vmatprep.subr.mxu0 0.0
      %286 = vmatpush1.msra.mxu0 0.0
      %287 = vmatprep.subr.mxu0 0.0
      %288 = vmatpush1.msra.mxu0 0.0
      %289 = vmatprep.subr.mxu0 0.0
      %290 = vmatpush1.msra.mxu0 0.0
      %291 = vmatprep.subr.mxu0 0.0
      %292 = vmatpush1.msra.mxu0 0.0
      %293 = vmatprep.subr.mxu0 0.0
      %294 = vmatpush1.msra.mxu0 0.0
      %295 = vmatprep.subr.mxu0 0.0
      %296 = vmatpush1.msra.mxu0 0.0
      %297 = vmatprep.subr.mxu0 0.0
      %298 = vmatpush1.msra.mxu0 0.0
      %299 = vmatprep.subr.mxu0 0.0
      %300 = vmatpush1.msra.mxu0 0.0
      %301 = vmatprep.subr.mxu0 0.0
      %302 = vmatpush1.msra.mxu0 0.0
      %303 = vmatprep.subr.mxu0 0.0
      %304 = vmatpush1.msra.mxu0 0.0
      %305 = vmatprep.subr.mxu0 0.0
      %306 = vmatpush1.msra.mxu0 0.0
      %307 = vmatprep.subr.mxu0 0.0
      %308 = vmatpush1.msra.mxu0 0.0
      %309 = vmatprep.subr.mxu0 0.0
      %310 = vmatpush1.msra.mxu0 0.0
      %311 = vmatprep.subr.mxu0 0.0
      %312 = vmatpush1.msra.mxu0 0.0
      %313 = vmatprep.subr.mxu0 0.0
      %314 = vmatpush1.msra.mxu0 0.0
      %315 = vmatprep.subr.mxu0 0.0
      %316 = vmatpush1.msra.mxu0 0.0
      %317 = vmatprep.subr.mxu0 0.0
      %318 = vmatpush1.msra.mxu0 0.0
      %319 = vmatprep.mubr.f32.mxu0 0.0
      %320 = vmatmul.mubr.f32.gmra.mrb[0].mxu0 %v244
      %v321 = vpop.f32.mrb[0].mxu0
      %v322 = vadd.f32 %v225, %v321
      %v323 = vpop.f32.mrb[0].mxu0
      %v324 = vadd.f32 %v225, %v323
      %325 = vmatprep.mubr.f32.mxu0 0.0
      %326 = vmatmul.mubr.f32.gmra.mrb[0].mxu0 %v247
      %v327 = vpop.f32.mrb[0].mxu0
      %v328 = vadd.f32 %v230, %v327
      %v329 = vpop.f32.mrb[0].mxu0
      %v330 = vadd.f32 %v230, %v329
      %331 = vmatprep.mubr.f32.mxu0 0.0
      %332 = vmatmul.mubr.f32.gmra.mrb[0].mxu0 %v250
      %v333 = vpop.f32.mrb[0].mxu0
      %v334 = vadd.f32 %v235, %v333
      %v335 = vpop.f32.mrb[0].mxu0
      %v336 = vadd.f32 %v235, %v335
      %337 = vmatprep.mubr.f32.mxu0 0.0
      %338 = vmatmul.mubr.f32.gmra.mrb[0].mxu0 %v253
      %v339 = vpop.f32.mrb[0].mxu0
      %v340 = vadd.f32 %v240, %v339
      %v341 = vpop.f32.mrb[0].mxu0
      %v342 = vadd.f32 %v240, %v341
      %343 = vdwg.mxu0
      %344 = vst [vmem:[%s208] sm:$0xff] %v322
      %345 = vst [vmem:[%s208 + $0x8] sm:$0xff] %v324
      %346 = vst [vmem:[%s208 + $0x10] sm:$0xff] %v328
      %347 = vst [vmem:[%s208 + $0x18] sm:$0xff] %v330
      %348 = vst [vmem:[%s208 + $0x20] sm:$0xff] %v334
      %349 = vst [vmem:[%s208 + $0x28] sm:$0xff] %v336
      %350 = vst [vmem:[%s208 + $0x30] sm:$0xff] %v340
      %351 = vst [vmem:[%s208 + $0x38] sm:$0xff] %v342
      %s352 = smul.u32 2, %s19
      %p353 = scmp.lt.s32.totalorder %s18, 1
      %s354 = scalar_select %p353, %s18, 1
      %p355 = scmp.lt.s32.totalorder %s352, 1
      %s356 = scalar_select %p355, %s352, 1
      %s357 = smul.addr %s354, 8
      %s358 = sadd.s32 %s356, %s357
      %s359 = smul.addr %s358, 8
      %s360 = scalar_lea.vmem %s3, %s359
      // Predicated region
      $region33: #{a_call__.1} parent=31 // pred_check
        %p361 = pneg %p116
      $region34: #{a_call__.1} parent=31 // pred_check_branch
        %363 = sbr.rel (%p361) target = $region36
      $region35: #{a_call__.1} parent=31 // pred_region
        %s364 = smul.u32 2, %s19
      $region36: #{a_call__.1} parent=31 // pred_fallthru
        _
    $region32: #{a_call__.1} parent=5 // pred_fallthru
      _
    %p365 = scmp.le.s32.totalorder 2, %s9
    // Predicated region
    $region37: #{a_call__.1} parent=5 // pred_check
      %p366 = pneg %p365
    $region38: #{a_call__.1} parent=5 // pred_check_branch
      %368 = sbr.rel (%p366) target = $region40
    $region39: #{a_call__.1} parent=5 // pred_region
      %s369 = ssub.s32 %s9, 2
      // Predicated region
      $region41: #{a_call__.1} parent=39 // pred_check
        %p370 = pneg %p122
      $region42: #{a_call__.1} parent=39 // pred_check_branch
        %372 = sbr.rel (%p370) target = $region44
      $region43: #{a_call__.1} parent=39 // pred_region
        %s373 = smul.u32 2, %s21
        %p374 = scmp.lt.s32.totalorder %s20, 1
        %s375 = scalar_select %p374, %s20, 1
        %p376 = scmp.lt.s32.totalorder %s373, 1
        %s377 = scalar_select %p376, %s373, 1
        %s378 = smul.addr %s375, 8
        %s379 = sadd.s32 %s377, %s378
        %s380 = smul.addr %s379, 8
        %s381 = scalar_lea.vmem %s3, %s380
      $region44: #{a_call__.1} parent=39 // pred_fallthru
        _
    $region40: #{a_call__.1} parent=5 // pred_fallthru
      _
  $region6: #{a_call__.1} parent=0 // loop_footer
    %s13 = sadd.s32 1, %s9
  $region7: #{a_call__.1} parent=0 // loop_footer_branch
    %8 = sbr.rel target = $region3
  $region8: #{a_call__.1} parent=0 // loop_exit
    _

</llo_original>
